<compile_context>
chip_gen: v5e
topology: v5e:2x2
jax: 0.10.0
libtpu: 0.0.40
codegen_flags: <defaults>
</compile_context>

<pallas_src>
import numpy as np
import jax
import jax.numpy as jnp
from jax.experimental import pallas as pl
from jax.experimental.pallas import tpu as pltpu

H = W = 7
HW = H * W            # 49 output positions
CIN = 128
COUT = 32
KH = KW = 3
K2 = KH * KW          # 9 taps
PAD = W + 1           # 8 rows of zero padding on each side of the flat input


def _make_width_masks() -> np.ndarray:
    """masks[0]: zero where w == 0 (dw=-1);  masks[1]: zero where w == W-1 (dw=+1)."""
    w_idx = np.arange(HW) % W
    masks = np.ones((2, HW, CIN), np.float32)
    masks[0, w_idx == 0, :] = 0.0
    masks[1, w_idx == W - 1, :] = 0.0
    return masks


_WIDTH_MASKS = jnp.asarray(_make_width_masks())


def conv3x3_im2col_kernel(x_ref, mask_ref, w_ref, out_ref, xpad, patches):
    # x_ref:    [HW, CIN]   f32  flattened channels-last input (row hw = 7*h + w)
    # mask_ref: [2, HW, CIN] f32 width-boundary masks
    # w_ref:    [COUT, K2*CIN] bf16 im2col weights (tap-major, then ci)
    # out_ref:  [COUT, HW]  f32  conv output, already channel-major (NCHW flat)
    # xpad:     VMEM [HW + 2*PAD, CIN] f32 scratch (zero-padded flat input)
    # patches:  VMEM [HW, K2*CIN] bf16 scratch (im2col matrix)

    # Fused zero padding (replaces the wrapper-side jnp.pad / XLA pad op).
    xpad[...] = jnp.zeros_like(xpad)
    xpad[PAD:PAD + HW, :] = x_ref[...]

    # Build the [49, 1152] im2col matrix: 9 sublane-shifted slices of the padded
    # flat input; taps that read across the width boundary are masked to zero.
    for kh in range(KH):
        for kw in range(KW):
            dh, dw = kh - 1, kw - 1
            shift = dh * W + dw                               # in [-8, 8]
            blk = xpad[PAD + shift:PAD + shift + HW, :]       # [49, 128] f32
            if dw == -1:
                blk = blk * mask_ref[0]
            elif dw == 1:
                blk = blk * mask_ref[1]
            tap = kh * KW + kw
            patches[:, tap * CIN:(tap + 1) * CIN] = blk.astype(jnp.bfloat16)

    # Single MXU matmul, NT (q @ k^T) orientation — output is channel-major:
    #   out[co, hw] = sum_k w[co, k] * patches[hw, k]
    acc = jax.lax.dot_general(
        w_ref[...], patches[...],
        dimension_numbers=(((1,), (1,)), ((), ())),
        preferred_element_type=jnp.float32,
    )                                                         # [COUT, HW] f32
    out_ref[...] = acc.astype(out_ref.dtype)                  # one store


def conv2d_3x3_same(x_nchw, weight_oihw):
    """Conv2d(128->32, 3x3, stride 1, pad 1, no bias). x: [1, CIN, H, W] NCHW."""
    # [1, CIN, H, W] -> [CIN, HW] (metadata-only) -> [HW, CIN] (one tiny transpose)
    x_flat = jnp.transpose(x_nchw.reshape(CIN, HW))
    # [COUT, CIN, KH, KW] -> [COUT, KH, KW, CIN] -> [COUT, K2*CIN], cast to bf16
    w_im2col = jnp.transpose(weight_oihw, (0, 2, 3, 1)).reshape(COUT, K2 * CIN)
    w_im2col = w_im2col.astype(jnp.bfloat16)

    out_flat = pl.pallas_call(
        conv3x3_im2col_kernel,
        out_shape=jax.ShapeDtypeStruct((COUT, HW), x_nchw.dtype),
        grid=(1,),
        in_specs=[
            pl.BlockSpec((HW, CIN), lambda i: (0, 0)),
            pl.BlockSpec((2, HW, CIN), lambda i: (0, 0, 0)),
            pl.BlockSpec((COUT, K2 * CIN), lambda i: (0, 0)),
        ],
        out_specs=pl.BlockSpec((COUT, HW), lambda i: (0, 0)),
        scratch_shapes=[
            pltpu.VMEM((HW + 2 * PAD, CIN), jnp.float32),
            pltpu.VMEM((HW, K2 * CIN), jnp.bfloat16),
        ],
    )(x_flat, _WIDTH_MASKS, w_im2col)

    # [COUT, HW] is already channel-major: reshape (metadata-only) to NCHW.
    return out_flat.reshape(1, COUT, H, W)


def forward(weight, x417, x313, x320, x327, x334, x341, x348, x355, x362,
            x369, x376, x383, x390, x397, x404, x411, x425):
    x418 = conv2d_3x3_same(x417, weight)
    # channel concat (pure layout glue) done in plain JAX
    x426 = jnp.concatenate(
        [x313, x320, x327, x334, x341, x348, x355, x362, x369, x376, x383,
         x390, x397, x404, x411, x418, x425],
        axis=1,
    )
    return x426


if __name__ == "__main__":
    key = jax.random.PRNGKey(0)
    keys = jax.random.split(key, 20)

    # deterministic "parameters": Conv2d(128, 32, 3, 3) weight, OIHW like torch
    weight = jax.random.normal(keys[0], (COUT, CIN, KH, KW), jnp.float32) * 0.05

    # inputs (shapes exactly as in the module)
    x417 = jax.random.normal(keys[1], (1, 128, 7, 7), jnp.float32)
    x313 = jax.random.normal(keys[2], (1, 512, 7, 7), jnp.float32)
    small = [jax.random.normal(keys[3 + i], (1, 32, 7, 7), jnp.float32)
             for i in range(15)]
    (x320, x327, x334, x341, x348, x355, x362, x369,
     x376, x383, x390, x397, x404, x411, x425) = small

    out = forward(weight, x417, x313, x320, x327, x334, x341, x348, x355,
                  x362, x369, x376, x383, x390, x397, x404, x411, x425)
    out = jax.block_until_ready(out)
    assert out.shape == (1, 1024, 7, 7), out.shape

    # sanity check: Pallas conv (bf16 MXU pass, f32 accumulation) vs an XLA
    # reference conv on bf16-rounded operands (same arithmetic, different order).
    xq = x417.astype(jnp.bfloat16).astype(jnp.float32)
    wq = weight.astype(jnp.bfloat16).astype(jnp.float32)
    ref_conv = jax.lax.conv_general_dilated(
        xq, wq, window_strides=(1, 1), padding=((1, 1), (1, 1)),
        dimension_numbers=("NCHW", "OIHW", "NCHW"),
        precision=jax.lax.Precision.HIGHEST,
    )
    pallas_conv = out[:, 512 + 14 * 32: 512 + 15 * 32]   # x418 slot in the concat
    max_err = float(jnp.max(jnp.abs(pallas_conv - ref_conv)))
    assert jnp.allclose(pallas_conv, ref_conv, rtol=1e-2, atol=1e-2), max_err

    print("KERNEL_OK")
</pallas_src>

<mosaic_0001>
module attributes {stable_mosaic.version = 11 : i64} {
  func.func @conv3x3_im2col_kernel(%arg0: i32, %arg1: memref<49x128xf32, #tpu.memory_space<vmem>>, %arg2: memref<2x49x128xf32, #tpu.memory_space<vmem>>, %arg3: memref<32x1152xbf16, #tpu.memory_space<vmem>>, %arg4: memref<32x49xf32, #tpu.memory_space<vmem>>, %arg5: memref<65x128xf32, #tpu.memory_space<vmem>>, %arg6: memref<49x1152xbf16, #tpu.memory_space<vmem>>) attributes {dimension_semantics = [#tpu.dimension_semantics<arbitrary>], iteration_bounds = array<i64: 1>, scalar_prefetch = 0 : i64, scratch_operands = 2 : i64, tpu.core_type = #tpu.core_type<tc>, window_params = [{pipeline_mode = #tpu.pipeline_mode<synchronous>, transform_indices = @transform_0, window_bounds = array<i64: 49, 128>}, {pipeline_mode = #tpu.pipeline_mode<synchronous>, transform_indices = @transform_1, window_bounds = array<i64: 2, 49, 128>}, {pipeline_mode = #tpu.pipeline_mode<synchronous>, transform_indices = @transform_2, window_bounds = array<i64: 32, 1152>}, {pipeline_mode = #tpu.pipeline_mode<synchronous>, transform_indices = @transform_3, window_bounds = array<i64: 32, 49>}]} {
    %cst = arith.constant 0.000000e+00 : f32
    %0 = vector.broadcast %cst : f32 to vector<65x128xf32>
    %c0 = arith.constant 0 : index
    %c0_0 = arith.constant 0 : index
    %1 = vector.load %arg5[%c0, %c0_0] : memref<65x128xf32, #tpu.memory_space<vmem>>, vector<65x128xf32>
    tpu.vector_store %arg5[%c0, %c0_0], %0 {strides = array<i32>} : memref<65x128xf32, #tpu.memory_space<vmem>>, vector<65x128xf32>,
    %c0_1 = arith.constant 0 : index
    %c0_2 = arith.constant 0 : index
    %2 = vector.load %arg1[%c0_1, %c0_2] : memref<49x128xf32, #tpu.memory_space<vmem>>, vector<49x128xf32>
    %c8 = arith.constant 8 : index
    %c0_3 = arith.constant 0 : index
    %3 = vector.load %arg5[%c8, %c0_3] : memref<65x128xf32, #tpu.memory_space<vmem>>, vector<49x128xf32>
    tpu.vector_store %arg5[%c8, %c0_3], %2 {strides = array<i32>} : memref<65x128xf32, #tpu.memory_space<vmem>>, vector<49x128xf32>,
    %c0_4 = arith.constant 0 : index
    %c0_5 = arith.constant 0 : index
    %4 = vector.load %arg5[%c0_4, %c0_5] : memref<65x128xf32, #tpu.memory_space<vmem>>, vector<49x128xf32>
    %c0_6 = arith.constant 0 : index
    %c0_7 = arith.constant 0 : index
    %c0_8 = arith.constant 0 : index
    %5 = vector.load %arg2[%c0_6, %c0_7, %c0_8] : memref<2x49x128xf32, #tpu.memory_space<vmem>>, vector<1x49x128xf32>
    %6 = vector.shape_cast %5 : vector<1x49x128xf32> to vector<49x128xf32>
    %7 = arith.mulf %4, %6 : vector<49x128xf32>
    %8 = arith.truncf %7 : vector<49x128xf32> to vector<49x128xbf16>
    %c0_9 = arith.constant 0 : index
    %c0_10 = arith.constant 0 : index
    %9 = vector.load %arg6[%c0_9, %c0_10] : memref<49x1152xbf16, #tpu.memory_space<vmem>>, vector<49x128xbf16>
    tpu.vector_store %arg6[%c0_9, %c0_10], %8 {strides = array<i32>} : memref<49x1152xbf16, #tpu.memory_space<vmem>>, vector<49x128xbf16>,
    %c1 = arith.constant 1 : index
    %c0_11 = arith.constant 0 : index
    %10 = vector.load %arg5[%c1, %c0_11] : memref<65x128xf32, #tpu.memory_space<vmem>>, vector<49x128xf32>
    %11 = arith.truncf %10 : vector<49x128xf32> to vector<49x128xbf16>
    %c0_12 = arith.constant 0 : index
    %c128 = arith.constant 128 : index
    %12 = vector.load %arg6[%c0_12, %c128] : memref<49x1152xbf16, #tpu.memory_space<vmem>>, vector<49x128xbf16>
    tpu.vector_store %arg6[%c0_12, %c128], %11 {strides = array<i32>} : memref<49x1152xbf16, #tpu.memory_space<vmem>>, vector<49x128xbf16>,
    %c2 = arith.constant 2 : index
    %c0_13 = arith.constant 0 : index
    %13 = vector.load %arg5[%c2, %c0_13] : memref<65x128xf32, #tpu.memory_space<vmem>>, vector<49x128xf32>
    %c1_14 = arith.constant 1 : index
    %c0_15 = arith.constant 0 : index
    %c0_16 = arith.constant 0 : index
    %14 = vector.load %arg2[%c1_14, %c0_15, %c0_16] : memref<2x49x128xf32, #tpu.memory_space<vmem>>, vector<1x49x128xf32>
    %15 = vector.shape_cast %14 : vector<1x49x128xf32> to vector<49x128xf32>
    %16 = arith.mulf %13, %15 : vector<49x128xf32>
    %17 = arith.truncf %16 : vector<49x128xf32> to vector<49x128xbf16>
    %c0_17 = arith.constant 0 : index
    %c256 = arith.constant 256 : index
    %18 = vector.load %arg6[%c0_17, %c256] : memref<49x1152xbf16, #tpu.memory_space<vmem>>, vector<49x128xbf16>
    tpu.vector_store %arg6[%c0_17, %c256], %17 {strides = array<i32>} : memref<49x1152xbf16, #tpu.memory_space<vmem>>, vector<49x128xbf16>,
    %c7 = arith.constant 7 : index
    %c0_18 = arith.constant 0 : index
    %19 = vector.load %arg5[%c7, %c0_18] : memref<65x128xf32, #tpu.memory_space<vmem>>, vector<49x128xf32>
    %c0_19 = arith.constant 0 : index
    %c0_20 = arith.constant 0 : index
    %c0_21 = arith.constant 0 : index
    %20 = vector.load %arg2[%c0_19, %c0_20, %c0_21] : memref<2x49x128xf32, #tpu.memory_space<vmem>>, vector<1x49x128xf32>
    %21 = vector.shape_cast %20 : vector<1x49x128xf32> to vector<49x128xf32>
    %22 = arith.mulf %19, %21 : vector<49x128xf32>
    %23 = arith.truncf %22 : vector<49x128xf32> to vector<49x128xbf16>
    %c0_22 = arith.constant 0 : index
    %c384 = arith.constant 384 : index
    %24 = vector.load %arg6[%c0_22, %c384] : memref<49x1152xbf16, #tpu.memory_space<vmem>>, vector<49x128xbf16>
    tpu.vector_store %arg6[%c0_22, %c384], %23 {strides = array<i32>} : memref<49x1152xbf16, #tpu.memory_space<vmem>>, vector<49x128xbf16>,
    %c8_23 = arith.constant 8 : index
    %c0_24 = arith.constant 0 : index
    %25 = vector.load %arg5[%c8_23, %c0_24] : memref<65x128xf32, #tpu.memory_space<vmem>>, vector<49x128xf32>
    %26 = arith.truncf %25 : vector<49x128xf32> to vector<49x128xbf16>
    %c0_25 = arith.constant 0 : index
    %c512 = arith.constant 512 : index
    %27 = vector.load %arg6[%c0_25, %c512] : memref<49x1152xbf16, #tpu.memory_space<vmem>>, vector<49x128xbf16>
    tpu.vector_store %arg6[%c0_25, %c512], %26 {strides = array<i32>} : memref<49x1152xbf16, #tpu.memory_space<vmem>>, vector<49x128xbf16>,
    %c9 = arith.constant 9 : index
    %c0_26 = arith.constant 0 : index
    %28 = vector.load %arg5[%c9, %c0_26] : memref<65x128xf32, #tpu.memory_space<vmem>>, vector<49x128xf32>
    %c1_27 = arith.constant 1 : index
    %c0_28 = arith.constant 0 : index
    %c0_29 = arith.constant 0 : index
    %29 = vector.load %arg2[%c1_27, %c0_28, %c0_29] : memref<2x49x128xf32, #tpu.memory_space<vmem>>, vector<1x49x128xf32>
    %30 = vector.shape_cast %29 : vector<1x49x128xf32> to vector<49x128xf32>
    %31 = arith.mulf %28, %30 : vector<49x128xf32>
    %32 = arith.truncf %31 : vector<49x128xf32> to vector<49x128xbf16>
    %c0_30 = arith.constant 0 : index
    %c640 = arith.constant 640 : index
    %33 = vector.load %arg6[%c0_30, %c640] : memref<49x1152xbf16, #tpu.memory_space<vmem>>, vector<49x128xbf16>
    tpu.vector_store %arg6[%c0_30, %c640], %32 {strides = array<i32>} : memref<49x1152xbf16, #tpu.memory_space<vmem>>, vector<49x128xbf16>,
    %c14 = arith.constant 14 : index
    %c0_31 = arith.constant 0 : index
    %34 = vector.load %arg5[%c14, %c0_31] : memref<65x128xf32, #tpu.memory_space<vmem>>, vector<49x128xf32>
    %c0_32 = arith.constant 0 : index
    %c0_33 = arith.constant 0 : index
    %c0_34 = arith.constant 0 : index
    %35 = vector.load %arg2[%c0_32, %c0_33, %c0_34] : memref<2x49x128xf32, #tpu.memory_space<vmem>>, vector<1x49x128xf32>
    %36 = vector.shape_cast %35 : vector<1x49x128xf32> to vector<49x128xf32>
    %37 = arith.mulf %34, %36 : vector<49x128xf32>
    %38 = arith.truncf %37 : vector<49x128xf32> to vector<49x128xbf16>
    %c0_35 = arith.constant 0 : index
    %c768 = arith.constant 768 : index
    %39 = vector.load %arg6[%c0_35, %c768] : memref<49x1152xbf16, #tpu.memory_space<vmem>>, vector<49x128xbf16>
    tpu.vector_store %arg6[%c0_35, %c768], %38 {strides = array<i32>} : memref<49x1152xbf16, #tpu.memory_space<vmem>>, vector<49x128xbf16>,
    %c15 = arith.constant 15 : index
    %c0_36 = arith.constant 0 : index
    %40 = vector.load %arg5[%c15, %c0_36] : memref<65x128xf32, #tpu.memory_space<vmem>>, vector<49x128xf32>
    %41 = arith.truncf %40 : vector<49x128xf32> to vector<49x128xbf16>
    %c0_37 = arith.constant 0 : index
    %c896 = arith.constant 896 : index
    %42 = vector.load %arg6[%c0_37, %c896] : memref<49x1152xbf16, #tpu.memory_space<vmem>>, vector<49x128xbf16>
    tpu.vector_store %arg6[%c0_37, %c896], %41 {strides = array<i32>} : memref<49x1152xbf16, #tpu.memory_space<vmem>>, vector<49x128xbf16>,
    %c16 = arith.constant 16 : index
    %c0_38 = arith.constant 0 : index
    %43 = vector.load %arg5[%c16, %c0_38] : memref<65x128xf32, #tpu.memory_space<vmem>>, vector<49x128xf32>
    %c1_39 = arith.constant 1 : index
    %c0_40 = arith.constant 0 : index
    %c0_41 = arith.constant 0 : index
    %44 = vector.load %arg2[%c1_39, %c0_40, %c0_41] : memref<2x49x128xf32, #tpu.memory_space<vmem>>, vector<1x49x128xf32>
    %45 = vector.shape_cast %44 : vector<1x49x128xf32> to vector<49x128xf32>
    %46 = arith.mulf %43, %45 : vector<49x128xf32>
    %47 = arith.truncf %46 : vector<49x128xf32> to vector<49x128xbf16>
    %c0_42 = arith.constant 0 : index
    %c1024 = arith.constant 1024 : index
    %48 = vector.load %arg6[%c0_42, %c1024] : memref<49x1152xbf16, #tpu.memory_space<vmem>>, vector<49x128xbf16>
    tpu.vector_store %arg6[%c0_42, %c1024], %47 {strides = array<i32>} : memref<49x1152xbf16, #tpu.memory_space<vmem>>, vector<49x128xbf16>,
    %c0_43 = arith.constant 0 : index
    %c0_44 = arith.constant 0 : index
    %49 = vector.load %arg3[%c0_43, %c0_44] : memref<32x1152xbf16, #tpu.memory_space<vmem>>, vector<32x1152xbf16>
    %c0_45 = arith.constant 0 : index
    %c0_46 = arith.constant 0 : index
    %50 = vector.load %arg6[%c0_45, %c0_46] : memref<49x1152xbf16, #tpu.memory_space<vmem>>, vector<49x1152xbf16>
    %cst_47 = arith.constant dense<0.000000e+00> : vector<32x49xf32>
    %51 = tpu.matmul %49, %50, %cst_47 {dimension_numbers = #tpu.dot_dimension_numbers<[1], [1], [0], [0], [0, 0, 1, 0], [], []>} : vector<32x1152xbf16>, vector<49x1152xbf16>, vector<32x49xf32> -> vector<32x49xf32>
    %c0_48 = arith.constant 0 : index
    %c0_49 = arith.constant 0 : index
    %52 = vector.load %arg4[%c0_48, %c0_49] : memref<32x49xf32, #tpu.memory_space<vmem>>, vector<32x49xf32>
    tpu.vector_store %arg4[%c0_48, %c0_49], %51 {strides = array<i32>} : memref<32x49xf32, #tpu.memory_space<vmem>>, vector<32x49xf32>,
    return
  }
  func.func @transform_0(%arg0: i32) -> (i32, i32) {
    %c0_i32 = arith.constant 0 : i32
    %c0_i32_0 = arith.constant 0 : i32
    %c0_i32_1 = arith.constant 0 : i32
    return %c0_i32, %c0_i32_0 : i32, i32
  }
  func.func @transform_1(%arg0: i32) -> (i32, i32, i32) {
    %c0_i32 = arith.constant 0 : i32
    %c0_i32_0 = arith.constant 0 : i32
    %c0_i32_1 = arith.constant 0 : i32
    %c0_i32_2 = arith.constant 0 : i32
    return %c0_i32, %c0_i32_0, %c0_i32_1 : i32, i32, i32
  }
  func.func @transform_2(%arg0: i32) -> (i32, i32) {
    %c0_i32 = arith.constant 0 : i32
    %c0_i32_0 = arith.constant 0 : i32
    %c0_i32_1 = arith.constant 0 : i32
    return %c0_i32, %c0_i32_0 : i32, i32
  }
  func.func @transform_3(%arg0: i32) -> (i32, i32) {
    %c0_i32 = arith.constant 0 : i32
    %c0_i32_0 = arith.constant 0 : i32
    %c0_i32_1 = arith.constant 0 : i32
    return %c0_i32, %c0_i32_0 : i32, i32
  }
}

</mosaic_0001>

<llo_original>
// kernel: tpu_custom_call.1
$region0: #{tpu_custom_call.1}
  #allocation0 [shape = 'u32[]', space=smem, size = 0x4, offset = 0x4, fixed_abs, tag = 'smem constant byte address 0x4 - core index']
  #allocation1 [shape = 'u32[72,128]{1,0:T(1,128)}', space=vmem, size = 0x9000, scoped, tag = 'internal scratch']
  #allocation2 [shape = 'f32[65,128]{1,0:T(8,128)}', space=vmem, size = 0x9000, scoped, tag = 'scratch operand']
  #allocation3 [shape = 'bf16[49,1152]{1,0:T(8,128)(2,1)}', space=vmem, size = 0x1f800, scoped, tag = 'scratch operand']
  %s0 = inlined_call_operand.vmem [shape: f32[49,128], index: 0, kind: input, shape index: {}]
  %s1 = inlined_call_operand.vmem [shape: f32[2,49,128], index: 1, kind: input, shape index: {}]
  %s2 = inlined_call_operand.vmem [shape: bf16[32,1152], index: 2, kind: input, shape index: {}]
  %s3 = inlined_call_operand.hbm [shape: f32[32,49], index: 3, kind: output, shape index: {}]
  %s4 = sld [smem:[#allocation0]]
  $region22: #{tpu_custom_call.1} parent=0
    _
  %s6 = ssub.s32 1, %s4
  %s7 = scalar_select 0, %s6, %s4
  $region1: #{tpu_custom_call.1} parent=0
    #allocation4 [shape = 'u8[16384]{0}', space=vmem, size = 0x4000, scoped, tag = 'output window, operand 0, single buffered']
    #allocation5 [shape = 's32[1]{0}', space=sflag, size = 0x4, scoped, tag = 'scoped memory for tpu_custom_call.1']
    %8 = vsyncpa [#allocation5], 0
    // Predicated region
    $region2: #{tpu_custom_call.1} parent=1 // pred_check
      _
    $region3: #{tpu_custom_call.1} parent=1 // pred_check_branch
      %10 = sbr.rel (0) target = $region5
    $region4: #{tpu_custom_call.1} parent=1 // pred_region
      _
    $region5: #{tpu_custom_call.1} parent=1 // pred_fallthru
      _
    // Predicated region
    $region6: #{tpu_custom_call.1} parent=1 // pred_check
      _
    $region7: #{tpu_custom_call.1} parent=1 // pred_check_branch
      %12 = sbr.rel (0) target = $region9
    $region8: #{tpu_custom_call.1} parent=1 // pred_region
      _
    $region9: #{tpu_custom_call.1} parent=1 // pred_fallthru
      _
    // Predicated region
    $region10: #{tpu_custom_call.1} parent=1 // pred_check
      _
    $region11: #{tpu_custom_call.1} parent=1 // pred_check_branch
      %14 = sbr.rel (0) target = $region13
    $region12: #{tpu_custom_call.1} parent=1 // pred_region
      _
    $region13: #{tpu_custom_call.1} parent=1 // pred_fallthru
      _
    %16 = vst [vmem:[#allocation2] sm:$0xff] 0.0
    %17 = vst [vmem:[#allocation2 + $0x8] sm:$0xff] 0.0
    %18 = vst [vmem:[#allocation2 + $0x10] sm:$0xff] 0.0
    %19 = vst [vmem:[#allocation2 + $0x18] sm:$0xff] 0.0
    %20 = vst [vmem:[#allocation2 + $0x20] sm:$0xff] 0.0
    %21 = vst [vmem:[#allocation2 + $0x28] sm:$0xff] 0.0
    %22 = vst [vmem:[#allocation2 + $0x30] sm:$0xff] 0.0
    %23 = vst [vmem:[#allocation2 + $0x38] sm:$0xff] 0.0
    %24 = vst [vmem:[#allocation2 + $0x40] sm:$0x1] 0.0
    %v25 = vld [vmem:[%s0] sm:$0xff]
    %v26 = vld [vmem:[%s0 + $0x8] sm:$0xff]
    %v27 = vld [vmem:[%s0 + $0x10] sm:$0xff]
    %v28 = vld [vmem:[%s0 + $0x18] sm:$0xff]
    %v29 = vld [vmem:[%s0 + $0x20] sm:$0xff]
    %v30 = vld [vmem:[%s0 + $0x28] sm:$0xff]
    %v31 = vld [vmem:[%s0 + $0x30] sm:$0x1]
    %32 = vst [vmem:[#allocation2 + $0x8] sm:$0xff] %v25
    %33 = vst [vmem:[#allocation2 + $0x10] sm:$0xff] %v26
    %34 = vst [vmem:[#allocation2 + $0x18] sm:$0xff] %v27
    %35 = vst [vmem:[#allocation2 + $0x20] sm:$0xff] %v28
    %36 = vst [vmem:[#allocation2 + $0x28] sm:$0xff] %v29
    %37 = vst [vmem:[#allocation2 + $0x30] sm:$0xff] %v30
    %38 = vst [vmem:[#allocation2 + $0x38] sm:$0x1] %v31
    %v39 = vld [vmem:[#allocation2] sm:$0xff]
    %v40 = vld [vmem:[#allocation2 + $0x8] sm:$0xff]
    %v41 = vld [vmem:[#allocation2 + $0x10] sm:$0xff]
    %v42 = vld [vmem:[#allocation2 + $0x18] sm:$0xff]
    %v43 = vld [vmem:[#allocation2 + $0x20] sm:$0xff]
    %v44 = vld [vmem:[#allocation2 + $0x28] sm:$0xff]
    %v45 = vld [vmem:[#allocation2 + $0x30] sm:$0x1]
    %v46 = vld [vmem:[%s1] sm:$0xff]
    %v47 = vld [vmem:[%s1 + $0x8] sm:$0xff]
    %v48 = vld [vmem:[%s1 + $0x10] sm:$0xff]
    %v49 = vld [vmem:[%s1 + $0x18] sm:$0xff]
    %v50 = vld [vmem:[%s1 + $0x20] sm:$0xff]
    %v51 = vld [vmem:[%s1 + $0x28] sm:$0xff]
    %v52 = vld [vmem:[%s1 + $0x30] sm:$0x1]
    %v53 = vmul.f32 %v39, %v46
    %v54 = vmul.f32 %v40, %v47
    %v55 = vmul.f32 %v41, %v48
    %v56 = vmul.f32 %v42, %v49
    %v57 = vmul.f32 %v43, %v50
    %v58 = vmul.f32 %v44, %v51
    %v59 = vmul.f32 %v45, %v52
    %v60 = vpack.c.bf16 %v53, %v53
    %v61 = vpack.c.bf16 %v54, %v54
    %v62 = vpack.c.bf16 %v55, %v55
    %v63 = vpack.c.bf16 %v56, %v56
    %v64 = vpack.c.bf16 %v57, %v57
    %v65 = vpack.c.bf16 %v58, %v58
    %v66 = vpack.c.bf16 %v59, %v59
    %67 = vst [vmem:[#allocation3] sm:$0xf] %v60
    %68 = vst [vmem:[#allocation3 + $0x24] sm:$0xf] %v61
    %69 = vst [vmem:[#allocation3 + $0x48] sm:$0xf] %v62
    %70 = vst [vmem:[#allocation3 + $0x6c] sm:$0xf] %v63
    %71 = vst [vmem:[#allocation3 + $0x90] sm:$0xf] %v64
    %72 = vst [vmem:[#allocation3 + $0xb4] sm:$0xf] %v65
    %vm73 = vcmask 1040384
    %vm74 = vsmask.f32 256
    %vm75 = vmand %vm73, %vm74
    %v76 = vld [vmem:[#allocation3 + $0xd8] sm:$0x1]
    %v77 = vsel %vm75, %v66, %v76
    %78 = vst [vmem:[#allocation3 + $0xd8] sm:$0x1] %v77
    %v79 = vld [vmem:[#allocation2 + $0x1] sm:$0xff]
    %v80 = vld [vmem:[#allocation2 + $0x9] sm:$0xff]
    %v81 = vld [vmem:[#allocation2 + $0x11] sm:$0xff]
    %v82 = vld [vmem:[#allocation2 + $0x19] sm:$0xff]
    %v83 = vld [vmem:[#allocation2 + $0x21] sm:$0xff]
    %v84 = vld [vmem:[#allocation2 + $0x29] sm:$0xff]
    %v85 = vld [vmem:[#allocation2 + $0x31] sm:$0x1]
    %v86 = vpack.c.bf16 %v79, %v79
    %v87 = vpack.c.bf16 %v80, %v80
    %v88 = vpack.c.bf16 %v81, %v81
    %v89 = vpack.c.bf16 %v82, %v82
    %v90 = vpack.c.bf16 %v83, %v83
    %v91 = vpack.c.bf16 %v84, %v84
    %v92 = vpack.c.bf16 %v85, %v85
    %93 = vst [vmem:[#allocation3 + $0x4] sm:$0xf] %v86
    %94 = vst [vmem:[#allocation3 + $0x28] sm:$0xf] %v87
    %95 = vst [vmem:[#allocation3 + $0x4c] sm:$0xf] %v88
    %96 = vst [vmem:[#allocation3 + $0x70] sm:$0xf] %v89
    %97 = vst [vmem:[#allocation3 + $0x94] sm:$0xf] %v90
    %98 = vst [vmem:[#allocation3 + $0xb8] sm:$0xf] %v91
    %v99 = vld [vmem:[#allocation3 + $0xdc] sm:$0x1]
    %v100 = vsel %vm75, %v92, %v99
    %101 = vst [vmem:[#allocation3 + $0xdc] sm:$0x1] %v100
    %v102 = vld [vmem:[#allocation2 + $0x2] sm:$0xff]
    %v103 = vld [vmem:[#allocation2 + $0xa] sm:$0xff]
    %v104 = vld [vmem:[#allocation2 + $0x12] sm:$0xff]
    %v105 = vld [vmem:[#allocation2 + $0x1a] sm:$0xff]
    %v106 = vld [vmem:[#allocation2 + $0x22] sm:$0xff]
    %v107 = vld [vmem:[#allocation2 + $0x2a] sm:$0xff]
    %v108 = vld [vmem:[#allocation2 + $0x32] sm:$0x1]
    %s109 = scalar_lea.vmem %s1, 56
    %v110 = vld [vmem:[%s109] sm:$0xff]
    %v111 = vld [vmem:[%s109 + $0x8] sm:$0xff]
    %v112 = vld [vmem:[%s109 + $0x10] sm:$0xff]
    %v113 = vld [vmem:[%s109 + $0x18] sm:$0xff]
    %v114 = vld [vmem:[%s109 + $0x20] sm:$0xff]
    %v115 = vld [vmem:[%s109 + $0x28] sm:$0xff]
    %v116 = vld [vmem:[%s109 + $0x30] sm:$0x1]
    %v117 = vmul.f32 %v102, %v110
    %v118 = vmul.f32 %v103, %v111
    %v119 = vmul.f32 %v104, %v112
    %v120 = vmul.f32 %v105, %v113
    %v121 = vmul.f32 %v106, %v114
    %v122 = vmul.f32 %v107, %v115
    %v123 = vmul.f32 %v108, %v116
    %v124 = vpack.c.bf16 %v117, %v117
    %v125 = vpack.c.bf16 %v118, %v118
    %v126 = vpack.c.bf16 %v119, %v119
    %v127 = vpack.c.bf16 %v120, %v120
    %v128 = vpack.c.bf16 %v121, %v121
    %v129 = vpack.c.bf16 %v122, %v122
    %v130 = vpack.c.bf16 %v123, %v123
    %131 = vst [vmem:[#allocation3 + $0x8] sm:$0xf] %v124
    %132 = vst [vmem:[#allocation3 + $0x2c] sm:$0xf] %v125
    %133 = vst [vmem:[#allocation3 + $0x50] sm:$0xf] %v126
    %134 = vst [vmem:[#allocation3 + $0x74] sm:$0xf] %v127
    %135 = vst [vmem:[#allocation3 + $0x98] sm:$0xf] %v128
    %136 = vst [vmem:[#allocation3 + $0xbc] sm:$0xf] %v129
    %v137 = vld [vmem:[#allocation3 + $0xe0] sm:$0x1]
    %v138 = vsel %vm75, %v130, %v137
    %139 = vst [vmem:[#allocation3 + $0xe0] sm:$0x1] %v138
    %v140 = vld [vmem:[#allocation2 + $0x7] sm:$0xff]
    %v141 = vld [vmem:[#allocation2 + $0xf] sm:$0xff]
    %v142 = vld [vmem:[#allocation2 + $0x17] sm:$0xff]
    %v143 = vld [vmem:[#allocation2 + $0x1f] sm:$0xff]
    %v144 = vld [vmem:[#allocation2 + $0x27] sm:$0xff]
    %v145 = vld [vmem:[#allocation2 + $0x2f] sm:$0xff]
    %v146 = vld [vmem:[#allocation2 + $0x37] sm:$0x1]
    %v147 = vld [vmem:[%s1] sm:$0xff]
    %v148 = vld [vmem:[%s1 + $0x8] sm:$0xff]
    %v149 = vld [vmem:[%s1 + $0x10] sm:$0xff]
    %v150 = vld [vmem:[%s1 + $0x18] sm:$0xff]
    %v151 = vld [vmem:[%s1 + $0x20] sm:$0xff]
    %v152 = vld [vmem:[%s1 + $0x28] sm:$0xff]
    %v153 = vld [vmem:[%s1 + $0x30] sm:$0x1]
    %v154 = vmul.f32 %v140, %v147
    %v155 = vmul.f32 %v141, %v148
    %v156 = vmul.f32 %v142, %v149
    %v157 = vmul.f32 %v143, %v150
    %v158 = vmul.f32 %v144, %v151
    %v159 = vmul.f32 %v145, %v152
    %v160 = vmul.f32 %v146, %v153
    %v161 = vpack.c.bf16 %v154, %v154
    %v162 = vpack.c.bf16 %v155, %v155
    %v163 = vpack.c.bf16 %v156, %v156
    %v164 = vpack.c.bf16 %v157, %v157
    %v165 = vpack.c.bf16 %v158, %v158
    %v166 = vpack.c.bf16 %v159, %v159
    %v167 = vpack.c.bf16 %v160, %v160
    %168 = vst [vmem:[#allocation3 + $0xc] sm:$0xf] %v161
    %169 = vst [vmem:[#allocation3 + $0x30] sm:$0xf] %v162
    %170 = vst [vmem:[#allocation3 + $0x54] sm:$0xf] %v163
    %171 = vst [vmem:[#allocation3 + $0x78] sm:$0xf] %v164
    %172 = vst [vmem:[#allocation3 + $0x9c] sm:$0xf] %v165
    %173 = vst [vmem:[#allocation3 + $0xc0] sm:$0xf] %v166
    %v174 = vld [vmem:[#allocation3 + $0xe4] sm:$0x1]
    %v175 = vsel %vm75, %v167, %v174
    %176 = vst [vmem:[#allocation3 + $0xe4] sm:$0x1] %v175
    %v177 = vld [vmem:[#allocation2 + $0x8] sm:$0xff]
    %v178 = vld [vmem:[#allocation2 + $0x10] sm:$0xff]
    %v179 = vld [vmem:[#allocation2 + $0x18] sm:$0xff]
    %v180 = vld [vmem:[#allocation2 + $0x20] sm:$0xff]
    %v181 = vld [vmem:[#allocation2 + $0x28] sm:$0xff]
    %v182 = vld [vmem:[#allocation2 + $0x30] sm:$0xff]
    %v183 = vld [vmem:[#allocation2 + $0x38] sm:$0x1]
    %v184 = vpack.c.bf16 %v177, %v177
    %v185 = vpack.c.bf16 %v178, %v178
    %v186 = vpack.c.bf16 %v179, %v179
    %v187 = vpack.c.bf16 %v180, %v180
    %v188 = vpack.c.bf16 %v181, %v181
    %v189 = vpack.c.bf16 %v182, %v182
    %v190 = vpack.c.bf16 %v183, %v183
    %191 = vst [vmem:[#allocation3 + $0x10] sm:$0xf] %v184
    %192 = vst [vmem:[#allocation3 + $0x34] sm:$0xf] %v185
    %193 = vst [vmem:[#allocation3 + $0x58] sm:$0xf] %v186
    %194 = vst [vmem:[#allocation3 + $0x7c] sm:$0xf] %v187
    %195 = vst [vmem:[#allocation3 + $0xa0] sm:$0xf] %v188
    %196 = vst [vmem:[#allocation3 + $0xc4] sm:$0xf] %v189
    %v197 = vld [vmem:[#allocation3 + $0xe8] sm:$0x1]
    %v198 = vsel %vm75, %v190, %v197
    %199 = vst [vmem:[#allocation3 + $0xe8] sm:$0x1] %v198
    %v200 = vld [vmem:[#allocation2 + $0x9] sm:$0xff]
    %v201 = vld [vmem:[#allocation2 + $0x11] sm:$0xff]
    %v202 = vld [vmem:[#allocation2 + $0x19] sm:$0xff]
    %v203 = vld [vmem:[#allocation2 + $0x21] sm:$0xff]
    %v204 = vld [vmem:[#allocation2 + $0x29] sm:$0xff]
    %v205 = vld [vmem:[#allocation2 + $0x31] sm:$0xff]
    %v206 = vld [vmem:[#allocation2 + $0x39] sm:$0x1]
    %v207 = vld [vmem:[%s109] sm:$0xff]
    %v208 = vld [vmem:[%s109 + $0x8] sm:$0xff]
    %v209 = vld [vmem:[%s109 + $0x10] sm:$0xff]
    %v210 = vld [vmem:[%s109 + $0x18] sm:$0xff]
    %v211 = vld [vmem:[%s109 + $0x20] sm:$0xff]
    %v212 = vld [vmem:[%s109 + $0x28] sm:$0xff]
    %v213 = vld [vmem:[%s109 + $0x30] sm:$0x1]
    %v214 = vmul.f32 %v200, %v207
    %v215 = vmul.f32 %v201, %v208
    %v216 = vmul.f32 %v202, %v209
    %v217 = vmul.f32 %v203, %v210
    %v218 = vmul.f32 %v204, %v211
    %v219 = vmul.f32 %v205, %v212
    %v220 = vmul.f32 %v206, %v213
    %v221 = vpack.c.bf16 %v214, %v214
    %v222 = vpack.c.bf16 %v215, %v215
    %v223 = vpack.c.bf16 %v216, %v216
    %v224 = vpack.c.bf16 %v217, %v217
    %v225 = vpack.c.bf16 %v218, %v218
    %v226 = vpack.c.bf16 %v219, %v219
    %v227 = vpack.c.bf16 %v220, %v220
    %228 = vst [vmem:[#allocation3 + $0x14] sm:$0xf] %v221
    %229 = vst [vmem:[#allocation3 + $0x38] sm:$0xf] %v222
    %230 = vst [vmem:[#allocation3 + $0x5c] sm:$0xf] %v223
    %231 = vst [vmem:[#allocation3 + $0x80] sm:$0xf] %v224
    %232 = vst [vmem:[#allocation3 + $0xa4] sm:$0xf] %v225
    %233 = vst [vmem:[#allocation3 + $0xc8] sm:$0xf] %v226
    %v234 = vld [vmem:[#allocation3 + $0xec] sm:$0x1]
    %v235 = vsel %vm75, %v227, %v234
    %236 = vst [vmem:[#allocation3 + $0xec] sm:$0x1] %v235
    %v237 = vld [vmem:[#allocation2 + $0xe] sm:$0xff]
    %v238 = vld [vmem:[#allocation2 + $0x16] sm:$0xff]
    %v239 = vld [vmem:[#allocation2 + $0x1e] sm:$0xff]
    %v240 = vld [vmem:[#allocation2 + $0x26] sm:$0xff]
    %v241 = vld [vmem:[#allocation2 + $0x2e] sm:$0xff]
    %v242 = vld [vmem:[#allocation2 + $0x36] sm:$0xff]
    %v243 = vld [vmem:[#allocation2 + $0x3e] sm:$0x1]
    %v244 = vld [vmem:[%s1] sm:$0xff]
    %v245 = vld [vmem:[%s1 + $0x8] sm:$0xff]
    %v246 = vld [vmem:[%s1 + $0x10] sm:$0xff]
    %v247 = vld [vmem:[%s1 + $0x18] sm:$0xff]
    %v248 = vld [vmem:[%s1 + $0x20] sm:$0xff]
    %v249 = vld [vmem:[%s1 + $0x28] sm:$0xff]
    %v250 = vld [vmem:[%s1 + $0x30] sm:$0x1]
    %v251 = vmul.f32 %v237, %v244
    %v252 = vmul.f32 %v238, %v245
    %v253 = vmul.f32 %v239, %v246
    %v254 = vmul.f32 %v240, %v247
    %v255 = vmul.f32 %v241, %v248
    %v256 = vmul.f32 %v242, %v249
    %v257 = vmul.f32 %v243, %v250
    %v258 = vpack.c.bf16 %v251, %v251
    %v259 = vpack.c.bf16 %v252, %v252
    %v260 = vpack.c.bf16 %v253, %v253
    %v261 = vpack.c.bf16 %v254, %v254
    %v262 = vpack.c.bf16 %v255, %v255
    %v263 = vpack.c.bf16 %v256, %v256
    %v264 = vpack.c.bf16 %v257, %v257
    %265 = vst [vmem:[#allocation3 + $0x18] sm:$0xf] %v258
    %266 = vst [vmem:[#allocation3 + $0x3c] sm:$0xf] %v259
    %267 = vst [vmem:[#allocation3 + $0x60] sm:$0xf] %v260
    %268 = vst [vmem:[#allocation3 + $0x84] sm:$0xf] %v261
    %269 = vst [vmem:[#allocation3 + $0xa8] sm:$0xf] %v262
    %270 = vst [vmem:[#allocation3 + $0xcc] sm:$0xf] %v263
    %v271 = vld [vmem:[#allocation3 + $0xf0] sm:$0x1]
    %v272 = vsel %vm75, %v264, %v271
    %273 = vst [vmem:[#allocation3 + $0xf0] sm:$0x1] %v272
    %v274 = vld [vmem:[#allocation2 + $0xf] sm:$0xff]
    %v275 = vld [vmem:[#allocation2 + $0x17] sm:$0xff]
    %v276 = vld [vmem:[#allocation2 + $0x1f] sm:$0xff]
    %v277 = vld [vmem:[#allocation2 + $0x27] sm:$0xff]
    %v278 = vld [vmem:[#allocation2 + $0x2f] sm:$0xff]
    %v279 = vld [vmem:[#allocation2 + $0x37] sm:$0xff]
    %v280 = vld [vmem:[#allocation2 + $0x3f] sm:$0x1]
    %v281 = vpack.c.bf16 %v274, %v274
    %v282 = vpack.c.bf16 %v275, %v275
    %v283 = vpack.c.bf16 %v276, %v276
    %v284 = vpack.c.bf16 %v277, %v277
    %v285 = vpack.c.bf16 %v278, %v278
    %v286 = vpack.c.bf16 %v279, %v279
    %v287 = vpack.c.bf16 %v280, %v280
    %288 = vst [vmem:[#allocation3 + $0x1c] sm:$0xf] %v281
    %289 = vst [vmem:[#allocation3 + $0x40] sm:$0xf] %v282
    %290 = vst [vmem:[#allocation3 + $0x64] sm:$0xf] %v283
    %291 = vst [vmem:[#allocation3 + $0x88] sm:$0xf] %v284
    %292 = vst [vmem:[#allocation3 + $0xac] sm:$0xf] %v285
    %293 = vst [vmem:[#allocation3 + $0xd0] sm:$0xf] %v286
    %v294 = vld [vmem:[#allocation3 + $0xf4] sm:$0x1]
    %v295 = vsel %vm75, %v287, %v294
    %296 = vst [vmem:[#allocation3 + $0xf4] sm:$0x1] %v295
    %v297 = vld [vmem:[#allocation2 + $0x10] sm:$0xff]
    %v298 = vld [vmem:[#allocation2 + $0x18] sm:$0xff]
    %v299 = vld [vmem:[#allocation2 + $0x20] sm:$0xff]
    %v300 = vld [vmem:[#allocation2 + $0x28] sm:$0xff]
    %v301 = vld [vmem:[#allocation2 + $0x30] sm:$0xff]
    %v302 = vld [vmem:[#allocation2 + $0x38] sm:$0xff]
    %v303 = vld [vmem:[#allocation2 + $0x40] sm:$0x1]
    %v304 = vld [vmem:[%s109] sm:$0xff]
    %v305 = vld [vmem:[%s109 + $0x8] sm:$0xff]
    %v306 = vld [vmem:[%s109 + $0x10] sm:$0xff]
    %v307 = vld [vmem:[%s109 + $0x18] sm:$0xff]
    %v308 = vld [vmem:[%s109 + $0x20] sm:$0xff]
    %v309 = vld [vmem:[%s109 + $0x28] sm:$0xff]
    %v310 = vld [vmem:[%s109 + $0x30] sm:$0x1]
    %v311 = vmul.f32 %v297, %v304
    %v312 = vmul.f32 %v298, %v305
    %v313 = vmul.f32 %v299, %v306
    %v314 = vmul.f32 %v300, %v307
    %v315 = vmul.f32 %v301, %v308
    %v316 = vmul.f32 %v302, %v309
    %v317 = vmul.f32 %v303, %v310
    %v318 = vpack.c.bf16 %v311, %v311
    %v319 = vpack.c.bf16 %v312, %v312
    %v320 = vpack.c.bf16 %v313, %v313
    %v321 = vpack.c.bf16 %v314, %v314
    %v322 = vpack.c.bf16 %v315, %v315
    %v323 = vpack.c.bf16 %v316, %v316
    %v324 = vpack.c.bf16 %v317, %v317
    %325 = vst [vmem:[#allocation3 + $0x20] sm:$0xf] %v318
    %326 = vst [vmem:[#allocation3 + $0x44] sm:$0xf] %v319
    %327 = vst [vmem:[#allocation3 + $0x68] sm:$0xf] %v320
    %328 = vst [vmem:[#allocation3 + $0x8c] sm:$0xf] %v321
    %329 = vst [vmem:[#allocation3 + $0xb0] sm:$0xf] %v322
    %330 = vst [vmem:[#allocation3 + $0xd4] sm:$0xf] %v323
    %v331 = vld [vmem:[#allocation3 + $0xf8] sm:$0x1]
    %v332 = vsel %vm75, %v324, %v331
    %333 = vst [vmem:[#allocation3 + $0xf8] sm:$0x1] %v332
    %v334 = vld [vmem:[%s2] sm:$0xff]
    %v335 = vld [vmem:[%s2 + $0x8] sm:$0xff]
    %v336 = vld [vmem:[%s2 + $0x10] sm:$0xff]
    %v337 = vld [vmem:[%s2 + $0x18] sm:$0xff]
    %v338 = vld [vmem:[%s2 + $0x20] sm:$0xf]
    %v339 = vld [vmem:[%s2 + $0x24] sm:$0xff]
    %v340 = vld [vmem:[%s2 + $0x2c] sm:$0xff]
    %v341 = vld [vmem:[%s2 + $0x34] sm:$0xff]
    %v342 = vld [vmem:[%s2 + $0x3c] sm:$0xff]
    %v343 = vld [vmem:[%s2 + $0x44] sm:$0xf]
    %v344 = vld [vmem:[%s2 + $0x48] sm:$0xff]
    %v345 = vld [vmem:[%s2 + $0x50] sm:$0xff]
    %v346 = vld [vmem:[%s2 + $0x58] sm:$0xff]
    %v347 = vld [vmem:[%s2 + $0x60] sm:$0xff]
    %v348 = vld [vmem:[%s2 + $0x68] sm:$0xf]
    %v349 = vld [vmem:[%s2 + $0x6c] sm:$0xff]
    %v350 = vld [vmem:[%s2 + $0x74] sm:$0xff]
    %v351 = vld [vmem:[%s2 + $0x7c] sm:$0xff]
    %v352 = vld [vmem:[%s2 + $0x84] sm:$0xff]
    %v353 = vld [vmem:[%s2 + $0x8c] sm:$0xf]
    %v354 = vld [vmem:[#allocation3] sm:$0xff]
    %v355 = vld [vmem:[#allocation3 + $0x8] sm:$0xff]
    %v356 = vld [vmem:[#allocation3 + $0x10] sm:$0xff]
    %v357 = vld [vmem:[#allocation3 + $0x18] sm:$0xff]
    %v358 = vld [vmem:[#allocation3 + $0x20] sm:$0xf]
    %v359 = vld [vmem:[#allocation3 + $0x24] sm:$0xff]
    %v360 = vld [vmem:[#allocation3 + $0x2c] sm:$0xff]
    %v361 = vld [vmem:[#allocation3 + $0x34] sm:$0xff]
    %v362 = vld [vmem:[#allocation3 + $0x3c] sm:$0xff]
    %v363 = vld [vmem:[#allocation3 + $0x44] sm:$0xf]
    %v364 = vld [vmem:[#allocation3 + $0x48] sm:$0xff]
    %v365 = vld [vmem:[#allocation3 + $0x50] sm:$0xff]
    %v366 = vld [vmem:[#allocation3 + $0x58] sm:$0xff]
    %v367 = vld [vmem:[#allocation3 + $0x60] sm:$0xff]
    %v368 = vld [vmem:[#allocation3 + $0x68] sm:$0xf]
    %v369 = vld [vmem:[#allocation3 + $0x6c] sm:$0xff]
    %v370 = vld [vmem:[#allocation3 + $0x74] sm:$0xff]
    %v371 = vld [vmem:[#allocation3 + $0x7c] sm:$0xff]
    %v372 = vld [vmem:[#allocation3 + $0x84] sm:$0xff]
    %v373 = vld [vmem:[#allocation3 + $0x8c] sm:$0xf]
    %v374 = vld [vmem:[#allocation3 + $0x90] sm:$0xff]
    %v375 = vld [vmem:[#allocation3 + $0x98] sm:$0xff]
    %v376 = vld [vmem:[#allocation3 + $0xa0] sm:$0xff]
    %v377 = vld [vmem:[#allocation3 + $0xa8] sm:$0xff]
    %v378 = vld [vmem:[#allocation3 + $0xb0] sm:$0xf]
    %v379 = vld [vmem:[#allocation3 + $0xb4] sm:$0xff]
    %v380 = vld [vmem:[#allocation3 + $0xbc] sm:$0xff]
    %v381 = vld [vmem:[#allocation3 + $0xc4] sm:$0xff]
    %v382 = vld [vmem:[#allocation3 + $0xcc] sm:$0xff]
    %v383 = vld [vmem:[#allocation3 + $0xd4] sm:$0xf]
    %v384 = vld [vmem:[#allocation3 + $0xd8] sm:$0x11]
    %v385 = vld [vmem:[#allocation3 + $0xe0] sm:$0x11]
    %v386 = vld [vmem:[#allocation3 + $0xe8] sm:$0x11]
    %v387 = vld [vmem:[#allocation3 + $0xf0] sm:$0x11]
    %v388 = vld [vmem:[#allocation3 + $0xf8] sm:$0x1]
    %v409 = vunpack.c.l.b16 %v334
    %v410 = vunpack.c.h.b16 %v334
    %v411 = vunpack.c.l.b16 %v335
    %v412 = vunpack.c.h.b16 %v335
    %v413 = vunpack.c.l.b16 %v336
    %v414 = vunpack.c.h.b16 %v336
    %v415 = vunpack.c.l.b16 %v337
    %v416 = vunpack.c.h.b16 %v337
    %v417 = vunpack.c.l.b16 %v338
    %v418 = vunpack.c.l.b16 %v339
    %v419 = vunpack.c.h.b16 %v339
    %v420 = vunpack.c.l.b16 %v340
    %v421 = vunpack.c.h.b16 %v340
    %v422 = vunpack.c.l.b16 %v341
    %v423 = vunpack.c.h.b16 %v341
    %v424 = vunpack.c.l.b16 %v342
    %v425 = vunpack.c.h.b16 %v342
    %v426 = vunpack.c.l.b16 %v343
    %v427 = vunpack.c.l.b16 %v344
    %v428 = vunpack.c.h.b16 %v344
    %v429 = vunpack.c.l.b16 %v345
    %v430 = vunpack.c.h.b16 %v345
    %v431 = vunpack.c.l.b16 %v346
    %v432 = vunpack.c.h.b16 %v346
    %v433 = vunpack.c.l.b16 %v347
    %v434 = vunpack.c.h.b16 %v347
    %v435 = vunpack.c.l.b16 %v348
    %v436 = vunpack.c.l.b16 %v349
    %v437 = vunpack.c.h.b16 %v349
    %v438 = vunpack.c.l.b16 %v350
    %v439 = vunpack.c.h.b16 %v350
    %v440 = vunpack.c.l.b16 %v351
    %v441 = vunpack.c.h.b16 %v351
    %v442 = vunpack.c.l.b16 %v352
    %v443 = vunpack.c.h.b16 %v352
    %v444 = vunpack.c.l.b16 %v353
    %v445 = vpack.c.b16 %v418, %v409
    %v446 = vpack.c.b16 %v419, %v410
    %v447 = vpack.c.b16 %v420, %v411
    %v448 = vpack.c.b16 %v421, %v412
    %v449 = vpack.c.b16 %v422, %v413
    %v450 = vpack.c.b16 %v423, %v414
    %v451 = vpack.c.b16 %v424, %v415
    %v452 = vpack.c.b16 %v425, %v416
    %v453 = vpack.c.b16 %v426, %v417
    %v454 = vpack.c.b16 %v436, %v427
    %v455 = vpack.c.b16 %v437, %v428
    %v456 = vpack.c.b16 %v438, %v429
    %v457 = vpack.c.b16 %v439, %v430
    %v458 = vpack.c.b16 %v440, %v431
    %v459 = vpack.c.b16 %v441, %v432
    %v460 = vpack.c.b16 %v442, %v433
    %v461 = vpack.c.b16 %v443, %v434
    %v462 = vpack.c.b16 %v444, %v435
    %v516 = vunpack.c.l.b16 %v354
    %v517 = vunpack.c.h.b16 %v354
    %v518 = vunpack.c.l.b16 %v355
    %v519 = vunpack.c.h.b16 %v355
    %v520 = vunpack.c.l.b16 %v356
    %v521 = vunpack.c.h.b16 %v356
    %v522 = vunpack.c.l.b16 %v357
    %v523 = vunpack.c.h.b16 %v357
    %v524 = vunpack.c.l.b16 %v358
    %v525 = vunpack.c.l.b16 %v359
    %v526 = vunpack.c.h.b16 %v359
    %v527 = vunpack.c.l.b16 %v360
    %v528 = vunpack.c.h.b16 %v360
    %v529 = vunpack.c.l.b16 %v361
    %v530 = vunpack.c.h.b16 %v361
    %v531 = vunpack.c.l.b16 %v362
    %v532 = vunpack.c.h.b16 %v362
    %v533 = vunpack.c.l.b16 %v363
    %v534 = vunpack.c.l.b16 %v364
    %v535 = vunpack.c.h.b16 %v364
    %v536 = vunpack.c.l.b16 %v365
    %v537 = vunpack.c.h.b16 %v365
    %v538 = vunpack.c.l.b16 %v366
    %v539 = vunpack.c.h.b16 %v366
    %v540 = vunpack.c.l.b16 %v367
    %v541 = vunpack.c.h.b16 %v367
    %v542 = vunpack.c.l.b16 %v368
    %v543 = vunpack.c.l.b16 %v369
    %v544 = vunpack.c.h.b16 %v369
    %v545 = vunpack.c.l.b16 %v370
    %v546 = vunpack.c.h.b16 %v370
    %v547 = vunpack.c.l.b16 %v371
    %v548 = vunpack.c.h.b16 %v371
    %v549 = vunpack.c.l.b16 %v372
    %v550 = vunpack.c.h.b16 %v372
    %v551 = vunpack.c.l.b16 %v373
    %v552 = vunpack.c.l.b16 %v374
    %v553 = vunpack.c.h.b16 %v374
    %v554 = vunpack.c.l.b16 %v375
    %v555 = vunpack.c.h.b16 %v375
    %v556 = vunpack.c.l.b16 %v376
    %v557 = vunpack.c.h.b16 %v376
    %v558 = vunpack.c.l.b16 %v377
    %v559 = vunpack.c.h.b16 %v377
    %v560 = vunpack.c.l.b16 %v378
    %v561 = vunpack.c.l.b16 %v379
    %v562 = vunpack.c.h.b16 %v379
    %v563 = vunpack.c.l.b16 %v380
    %v564 = vunpack.c.h.b16 %v380
    %v565 = vunpack.c.l.b16 %v381
    %v566 = vunpack.c.h.b16 %v381
    %v567 = vunpack.c.l.b16 %v382
    %v568 = vunpack.c.h.b16 %v382
    %v569 = vunpack.c.l.b16 %v383
    %v570 = vunpack.c.l.b16 %v384
    %v571 = vunpack.c.h.b16 %v384
    %v572 = vunpack.c.l.b16 %v385
    %v573 = vunpack.c.h.b16 %v385
    %v574 = vunpack.c.l.b16 %v386
    %v575 = vunpack.c.h.b16 %v386
    %v576 = vunpack.c.l.b16 %v387
    %v577 = vunpack.c.h.b16 %v387
    %v578 = vunpack.c.l.b16 %v388
    %v579 = vpack.c.b16 %v525, %v516
    %v580 = vpack.c.b16 %v526, %v517
    %v581 = vpack.c.b16 %v527, %v518
    %v582 = vpack.c.b16 %v528, %v519
    %v583 = vpack.c.b16 %v529, %v520
    %v584 = vpack.c.b16 %v530, %v521
    %v585 = vpack.c.b16 %v531, %v522
    %v586 = vpack.c.b16 %v532, %v523
    %v587 = vpack.c.b16 %v533, %v524
    %v588 = vpack.c.b16 %v543, %v534
    %v589 = vpack.c.b16 %v544, %v535
    %v590 = vpack.c.b16 %v545, %v536
    %v591 = vpack.c.b16 %v546, %v537
    %v592 = vpack.c.b16 %v547, %v538
    %v593 = vpack.c.b16 %v548, %v539
    %v594 = vpack.c.b16 %v549, %v540
    %v595 = vpack.c.b16 %v550, %v541
    %v596 = vpack.c.b16 %v551, %v542
    %v597 = vpack.c.b16 %v561, %v552
    %v598 = vpack.c.b16 %v562, %v553
    %v599 = vpack.c.b16 %v563, %v554
    %v600 = vpack.c.b16 %v564, %v555
    %v601 = vpack.c.b16 %v565, %v556
    %v602 = vpack.c.b16 %v566, %v557
    %v603 = vpack.c.b16 %v567, %v558
    %v604 = vpack.c.b16 %v568, %v559
    %v605 = vpack.c.b16 %v569, %v560
    %v606 = vpack.c.b16 %v570, %v570
    %v607 = vpack.c.b16 %v571, %v571
    %v608 = vpack.c.b16 %v572, %v572
    %v609 = vpack.c.b16 %v573, %v573
    %v610 = vpack.c.b16 %v574, %v574
    %v611 = vpack.c.b16 %v575, %v575
    %v612 = vpack.c.b16 %v576, %v576
    %v613 = vpack.c.b16 %v577, %v577
    %v614 = vpack.c.b16 %v578, %v578
    %651 = vmatpush.bf16.xpose.msra.mxu0 0
    %652 = vmatpush.bf16.xpose.msra.mxu0 0
    %653 = vmatpush.bf16.xpose.msra.mxu0 0
    %654 = vmatpush.bf16.xpose.msra.mxu0 0
    %655 = vmatpush.bf16.xpose.msra.mxu0 %v606
    %656 = vmatpush.bf16.xpose.msra.mxu0 %v597
    %657 = vmatpush.bf16.xpose.msra.mxu0 %v588
    %658 = vmatpush.bf16.xpose.msra.mxu0 %v579
    %659 = vmatmul.bf16.gmra.mxu0 %v445
    %v660 = vpop.f32.mrf.mxu0
    %v661 = vadd.f32 0.0, %v660
    %v662 = vpop.f32.mrf.mxu0
    %v663 = vadd.f32 0.0, %v662
    %664 = vmatmul.bf16.gmra.mxu0 %v454
    %v665 = vpop.f32.mrf.mxu0
    %v666 = vadd.f32 0.0, %v665
    %v667 = vpop.f32.mrf.mxu0
    %v668 = vadd.f32 0.0, %v667
    %669 = vdwg.mxu0
    %670 = vmatpush.bf16.xpose.msra.mxu0 0
    %671 = vmatpush.bf16.xpose.msra.mxu0 0
    %672 = vmatpush.bf16.xpose.msra.mxu0 0
    %673 = vmatpush.bf16.xpose.msra.mxu0 0
    %674 = vmatpush.bf16.xpose.msra.mxu0 %v607
    %675 = vmatpush.bf16.xpose.msra.mxu0 %v598
    %676 = vmatpush.bf16.xpose.msra.mxu0 %v589
    %677 = vmatpush.bf16.xpose.msra.mxu0 %v580
    %678 = vmatmul.bf16.gmra.mxu0 %v446
    %v679 = vpop.f32.mrf.mxu0
    %v680 = vadd.f32 %v661, %v679
    %v681 = vpop.f32.mrf.mxu0
    %v682 = vadd.f32 %v663, %v681
    %683 = vmatmul.bf16.gmra.mxu0 %v455
    %v684 = vpop.f32.mrf.mxu0
    %v685 = vadd.f32 %v666, %v684
    %v686 = vpop.f32.mrf.mxu0
    %v687 = vadd.f32 %v668, %v686
    %688 = vdwg.mxu0
    %689 = vmatpush.bf16.xpose.msra.mxu0 0
    %690 = vmatpush.bf16.xpose.msra.mxu0 0
    %691 = vmatpush.bf16.xpose.msra.mxu0 0
    %692 = vmatpush.bf16.xpose.msra.mxu0 0
    %693 = vmatpush.bf16.xpose.msra.mxu0 %v608
    %694 = vmatpush.bf16.xpose.msra.mxu0 %v599
    %695 = vmatpush.bf16.xpose.msra.mxu0 %v590
    %696 = vmatpush.bf16.xpose.msra.mxu0 %v581
    %697 = vmatmul.bf16.gmra.mxu0 %v447
    %v698 = vpop.f32.mrf.mxu0
    %v699 = vadd.f32 %v680, %v698
    %v700 = vpop.f32.mrf.mxu0
    %v701 = vadd.f32 %v682, %v700
    %702 = vmatmul.bf16.gmra.mxu0 %v456
    %v703 = vpop.f32.mrf.mxu0
    %v704 = vadd.f32 %v685, %v703
    %v705 = vpop.f32.mrf.mxu0
    %v706 = vadd.f32 %v687, %v705
    %707 = vdwg.mxu0
    %708 = vmatpush.bf16.xpose.msra.mxu0 0
    %709 = vmatpush.bf16.xpose.msra.mxu0 0
    %710 = vmatpush.bf16.xpose.msra.mxu0 0
    %711 = vmatpush.bf16.xpose.msra.mxu0 0
    %712 = vmatpush.bf16.xpose.msra.mxu0 %v609
    %713 = vmatpush.bf16.xpose.msra.mxu0 %v600
    %714 = vmatpush.bf16.xpose.msra.mxu0 %v591
    %715 = vmatpush.bf16.xpose.msra.mxu0 %v582
    %716 = vmatmul.bf16.gmra.mxu0 %v448
    %v717 = vpop.f32.mrf.mxu0
    %v718 = vadd.f32 %v699, %v717
    %v719 = vpop.f32.mrf.mxu0
    %v720 = vadd.f32 %v701, %v719
    %721 = vmatmul.bf16.gmra.mxu0 %v457
    %v722 = vpop.f32.mrf.mxu0
    %v723 = vadd.f32 %v704, %v722
    %v724 = vpop.f32.mrf.mxu0
    %v725 = vadd.f32 %v706, %v724
    %726 = vdwg.mxu0
    %727 = vmatpush.bf16.xpose.msra.mxu0 0
    %728 = vmatpush.bf16.xpose.msra.mxu0 0
    %729 = vmatpush.bf16.xpose.msra.mxu0 0
    %730 = vmatpush.bf16.xpose.msra.mxu0 0
    %731 = vmatpush.bf16.xpose.msra.mxu0 %v610
    %732 = vmatpush.bf16.xpose.msra.mxu0 %v601
    %733 = vmatpush.bf16.xpose.msra.mxu0 %v592
    %734 = vmatpush.bf16.xpose.msra.mxu0 %v583
    %735 = vmatmul.bf16.gmra.mxu0 %v449
    %v736 = vpop.f32.mrf.mxu0
    %v737 = vadd.f32 %v718, %v736
    %v738 = vpop.f32.mrf.mxu0
    %v739 = vadd.f32 %v720, %v738
    %740 = vmatmul.bf16.gmra.mxu0 %v458
    %v741 = vpop.f32.mrf.mxu0
    %v742 = vadd.f32 %v723, %v741
    %v743 = vpop.f32.mrf.mxu0
    %v744 = vadd.f32 %v725, %v743
    %745 = vdwg.mxu0
    %746 = vmatpush.bf16.xpose.msra.mxu0 0
    %747 = vmatpush.bf16.xpose.msra.mxu0 0
    %748 = vmatpush.bf16.xpose.msra.mxu0 0
    %749 = vmatpush.bf16.xpose.msra.mxu0 0
    %750 = vmatpush.bf16.xpose.msra.mxu0 %v611
    %751 = vmatpush.bf16.xpose.msra.mxu0 %v602
    %752 = vmatpush.bf16.xpose.msra.mxu0 %v593
    %753 = vmatpush.bf16.xpose.msra.mxu0 %v584
    %754 = vmatmul.bf16.gmra.mxu0 %v450
    %v755 = vpop.f32.mrf.mxu0
    %v756 = vadd.f32 %v737, %v755
    %v757 = vpop.f32.mrf.mxu0
    %v758 = vadd.f32 %v739, %v757
    %759 = vmatmul.bf16.gmra.mxu0 %v459
    %v760 = vpop.f32.mrf.mxu0
    %v761 = vadd.f32 %v742, %v760
    %v762 = vpop.f32.mrf.mxu0
    %v763 = vadd.f32 %v744, %v762
    %764 = vdwg.mxu0
    %765 = vmatpush.bf16.xpose.msra.mxu0 0
    %766 = vmatpush.bf16.xpose.msra.mxu0 0
    %767 = vmatpush.bf16.xpose.msra.mxu0 0
    %768 = vmatpush.bf16.xpose.msra.mxu0 0
    %769 = vmatpush.bf16.xpose.msra.mxu0 %v612
    %770 = vmatpush.bf16.xpose.msra.mxu0 %v603
    %771 = vmatpush.bf16.xpose.msra.mxu0 %v594
    %772 = vmatpush.bf16.xpose.msra.mxu0 %v585
    %773 = vmatmul.bf16.gmra.mxu0 %v451
    %v774 = vpop.f32.mrf.mxu0
    %v775 = vadd.f32 %v756, %v774
    %v776 = vpop.f32.mrf.mxu0
    %v777 = vadd.f32 %v758, %v776
    %778 = vmatmul.bf16.gmra.mxu0 %v460
    %v779 = vpop.f32.mrf.mxu0
    %v780 = vadd.f32 %v761, %v779
    %v781 = vpop.f32.mrf.mxu0
    %v782 = vadd.f32 %v763, %v781
    %783 = vdwg.mxu0
    %784 = vmatpush.bf16.xpose.msra.mxu0 0
    %785 = vmatpush.bf16.xpose.msra.mxu0 0
    %786 = vmatpush.bf16.xpose.msra.mxu0 0
    %787 = vmatpush.bf16.xpose.msra.mxu0 0
    %788 = vmatpush.bf16.xpose.msra.mxu0 %v613
    %789 = vmatpush.bf16.xpose.msra.mxu0 %v604
    %790 = vmatpush.bf16.xpose.msra.mxu0 %v595
    %791 = vmatpush.bf16.xpose.msra.mxu0 %v586
    %792 = vmatmul.bf16.gmra.mxu0 %v452
    %v793 = vpop.f32.mrf.mxu0
    %v794 = vadd.f32 %v775, %v793
    %v795 = vpop.f32.mrf.mxu0
    %v796 = vadd.f32 %v777, %v795
    %797 = vmatmul.bf16.gmra.mxu0 %v461
    %v798 = vpop.f32.mrf.mxu0
    %v799 = vadd.f32 %v780, %v798
    %v800 = vpop.f32.mrf.mxu0
    %v801 = vadd.f32 %v782, %v800
    %802 = vdwg.mxu0
    %803 = vmatpush.bf16.xpose.msra.mxu0 0
    %804 = vmatpush.bf16.xpose.msra.mxu0 0
    %805 = vmatpush.bf16.xpose.msra.mxu0 0
    %806 = vmatpush.bf16.xpose.msra.mxu0 0
    %807 = vmatpush.bf16.xpose.msra.mxu0 %v614
    %808 = vmatpush.bf16.xpose.msra.mxu0 %v605
    %809 = vmatpush.bf16.xpose.msra.mxu0 %v596
    %810 = vmatpush.bf16.xpose.msra.mxu0 %v587
    %811 = vmatmul.bf16.gmra.mxu0 %v453
    %v812 = vpop.f32.mrf.mxu0
    %v813 = vadd.f32 %v794, %v812
    %v814 = vpop.f32.mrf.mxu0
    %v815 = vadd.f32 %v796, %v814
    %816 = vmatmul.bf16.gmra.mxu0 %v462
    %v817 = vpop.f32.mrf.mxu0
    %v818 = vadd.f32 %v799, %v817
    %v819 = vpop.f32.mrf.mxu0
    %v820 = vadd.f32 %v801, %v819
    %821 = vdwg.mxu0
    %vm822 = vcmask 400384
    %823 = vst.msk [vmem:[#allocation4] sm:$0xff] %vm822, %v813
    %824 = vst.msk [vmem:[#allocation4 + $0x8] sm:$0xff] %vm822, %v815
    %825 = vst.msk [vmem:[#allocation4 + $0x10] sm:$0xff] %vm822, %v818
    %826 = vst.msk [vmem:[#allocation4 + $0x18] sm:$0xff] %vm822, %v820
    // Predicated region
    $region14: #{tpu_custom_call.1} parent=1 // pred_check
      _
    $region15: #{tpu_custom_call.1} parent=1 // pred_check_branch
      %828 = sbr.rel (0) target = $region17
    $region16: #{tpu_custom_call.1} parent=1 // pred_region
      %830 = vsyncadd [#allocation5], 0
      %s831 = sshll.u32 [#allocation4], 4
      %s832 = int_to_ptr.vmem [resolvable:$true] %s831
      %s833 = sshll.u32 %s3, 4
      %s834 = int_to_ptr.hbm [resolvable:$true] %s833
      %839 = dma.vmem_to_hbm [thread:$0]  %s832, 512, %s834, [#allocation5], 128, 128, 8
    $region17: #{tpu_custom_call.1} parent=1 // pred_fallthru
      _
    // Predicated region
    $region18: #{tpu_custom_call.1} parent=1 // pred_check
      _
    $region19: #{tpu_custom_call.1} parent=1 // pred_check_branch
      %841 = sbr.rel (0) target = $region21
    $region20: #{tpu_custom_call.1} parent=1 // pred_region
      %843 = dma.done [#allocation5], 512
    $region21: #{tpu_custom_call.1} parent=1 // pred_fallthru
      _
    %844 = vsyncpa [#allocation5], 1

</llo_original>
